<compile_context>
chip_gen: v7x
topology: tpu7x:2x2x1
jax: 0.10.0
libtpu: 0.0.40
codegen_flags: <defaults>
</compile_context>

<pallas_src>
import jax
import jax.numpy as jnp
from jax.experimental import pallas as pl
from jax.experimental.pallas import tpu as pltpu

NUM_CATEGORIES = 43          # len(Categories) — description.txt unavailable; fixed deterministically
IN_FEATURES = 15 * 15 * 3    # 675
H1 = 128
H2 = 64

# Lane-padded sizes (multiples of 128 -> full (8,128) tiles, unmasked vst).
K_PAD = 768                  # 675 -> 768
H2_PAD = 128                 # 64  -> 128
N_PAD = 128                  # 43  -> 128

TB_MAX = 2048                # ~8-9 MiB VMEM with double-buffering at TB=2048


def _round_up(x, m):
    return (x + m - 1) // m * m


def _choose_tb(B):
    """Batch tile: multiple of 8, capped at TB_MAX, and (when B is big enough)
    chosen so the grid has >=2 steps so v7x can shard the 'parallel' batch axis
    across both TensorCores. On v5e/v6e (single TC) this costs nothing."""
    b8 = _round_up(B, 8)
    if b8 <= 16:
        return b8
    half = _round_up(-(-b8 // 2), 8)          # ceil(b8/2) rounded up to 8
    return max(8, min(TB_MAX, half))


def _mlp_kernel(x_ref, w1_ref, b1_ref, w2_ref, b2_ref, w3_ref, b3_ref, o_ref):
    # x_ref: (TB, K_PAD) bf16; weights bf16 stored (in, out); biases f32.
    x = x_ref[...]
    h1 = jnp.dot(x, w1_ref[...], preferred_element_type=jnp.float32) + b1_ref[...]
    h1 = jnp.maximum(h1, 0.0).astype(jnp.bfloat16)              # torch.relu(fc1(x))
    h2 = jnp.dot(h1, w2_ref[...], preferred_element_type=jnp.float32) + b2_ref[...]
    h2 = jnp.maximum(h2, 0.0).astype(jnp.bfloat16)              # torch.relu(fc2(x))
    out = jnp.dot(h2, w3_ref[...], preferred_element_type=jnp.float32) + b3_ref[...]
    o_ref[...] = out.astype(o_ref.dtype)                        # fc3(x), no activation


def _pad_params(params):
    """Zero-pad weights/biases to lane-friendly shapes (math unchanged); bf16 weights."""
    w1, b1, w2, b2, w3, b3 = params
    w1p = jnp.pad(w1, ((0, K_PAD - IN_FEATURES), (0, 0))).astype(jnp.bfloat16)
    w2p = jnp.pad(w2, ((0, 0), (0, H2_PAD - H2))).astype(jnp.bfloat16)
    b2p = jnp.pad(b2, ((0, 0), (0, H2_PAD - H2))).astype(jnp.float32)
    w3p = jnp.pad(w3, ((0, H2_PAD - H2), (0, N_PAD - NUM_CATEGORIES))).astype(jnp.bfloat16)
    b3p = jnp.pad(b3, ((0, 0), (0, N_PAD - NUM_CATEGORIES))).astype(jnp.float32)
    return (w1p, b1.astype(jnp.float32), w2p, b2p, w3p, b3p)


def traffic_sign_net_forward(x_nchw, params):
    """x_nchw: (B, 3, 15, 15) float32. Returns logits (B, NUM_CATEGORIES) bfloat16."""
    B = x_nchw.shape[0]
    TB = _choose_tb(B)
    B_pad = _round_up(B, TB)

    # x.view(-1, 675): NCHW row-major flatten over (C, H, W), then a SINGLE fused
    # pad (batch + feature) + bf16 cast -> one HBM materialization of the input.
    x_flat = x_nchw.reshape(B, IN_FEATURES)
    x_pad = jnp.pad(
        x_flat, ((0, B_pad - B), (0, K_PAD - IN_FEATURES))
    ).astype(jnp.bfloat16)

    w1, b1, w2, b2, w3, b3 = _pad_params(params)

    grid = (B_pad // TB,)
    const = lambda i: (0, 0)   # weights/biases: VMEM-resident across all batch tiles

    # Advisory cost estimate for XLA's scheduler around the custom call.
    flops = 2 * B_pad * (K_PAD * H1 + H1 * H2_PAD + H2_PAD * N_PAD)
    bytes_accessed = (
        B_pad * K_PAD * 2                                   # x in (bf16)
        + B_pad * N_PAD * 2                                 # out (bf16)
        + (K_PAD * H1 + H1 * H2_PAD + H2_PAD * N_PAD) * 2   # weights (bf16)
        + (H1 + H2_PAD + N_PAD) * 4)                        # biases (f32)

    out = pl.pallas_call(
        _mlp_kernel,
        out_shape=jax.ShapeDtypeStruct((B_pad, N_PAD), jnp.bfloat16),
        grid=grid,
        in_specs=[
            pl.BlockSpec((TB, K_PAD), lambda i: (i, 0)),      # x: streamed per batch tile
            pl.BlockSpec((K_PAD, H1), const),                 # w1
            pl.BlockSpec((1, H1), const),                     # b1
            pl.BlockSpec((H1, H2_PAD), const),                # w2
            pl.BlockSpec((1, H2_PAD), const),                 # b2
            pl.BlockSpec((H2_PAD, N_PAD), const),             # w3
            pl.BlockSpec((1, N_PAD), const),                  # b3
        ],
        out_specs=pl.BlockSpec((TB, N_PAD), lambda i: (i, 0)),
        compiler_params=pltpu.CompilerParams(
            dimension_semantics=("parallel",),
            vmem_limit_bytes=32 * 1024 * 1024),
        cost_estimate=pl.CostEstimate(
            flops=flops, transcendentals=0, bytes_accessed=bytes_accessed),
    )(x_pad, w1, b1, w2, b2, w3, b3)

    # Callers able to consume the padded (B_pad, 128) slab can skip this slice.
    return out[:B, :NUM_CATEGORIES]


def init_params(key):
    """Deterministic init matching the nn.Module shapes.

    Weights are stored transposed relative to torch (in, out) so the kernel
    computes x @ W + b, semantically identical to torch's x @ W_t.T + b.
    """
    k1, k2, k3, k4, k5, k6 = jax.random.split(key, 6)
    s1 = 1.0 / jnp.sqrt(IN_FEATURES)
    s2 = 1.0 / jnp.sqrt(H1)
    s3 = 1.0 / jnp.sqrt(H2)
    w1 = jax.random.uniform(k1, (IN_FEATURES, H1), jnp.float32, -s1, s1)
    b1 = jax.random.uniform(k2, (1, H1), jnp.float32, -s1, s1)
    w2 = jax.random.uniform(k3, (H1, H2), jnp.float32, -s2, s2)
    b2 = jax.random.uniform(k4, (1, H2), jnp.float32, -s2, s2)
    w3 = jax.random.uniform(k5, (H2, NUM_CATEGORIES), jnp.float32, -s3, s3)
    b3 = jax.random.uniform(k6, (1, NUM_CATEGORIES), jnp.float32, -s3, s3)
    return (w1, b1, w2, b2, w3, b3)


if __name__ == "__main__":
    key = jax.random.PRNGKey(0)
    pkey, xkey = jax.random.split(key)
    params = init_params(pkey)

    # Small batch of RGB 15x15 images, NCHW like the PyTorch module expects.
    B = 2
    x = jax.random.normal(xkey, (B, 3, 15, 15), dtype=jnp.float32)

    logits = traffic_sign_net_forward(x, params)
    jax.block_until_ready(logits)
    assert logits.shape == (B, NUM_CATEGORIES)

    # Pure-JAX reference of the same math at the same precision
    # (bf16 operands, f32 accumulation, bf16 output), tolerances stay tight.
    w1, b1, w2, b2, w3, b3 = params
    xb = x.reshape(B, IN_FEATURES).astype(jnp.bfloat16)
    ref = jnp.dot(xb, w1.astype(jnp.bfloat16), preferred_element_type=jnp.float32) + b1
    ref = jnp.maximum(ref, 0.0).astype(jnp.bfloat16)
    ref = jnp.dot(ref, w2.astype(jnp.bfloat16), preferred_element_type=jnp.float32) + b2
    ref = jnp.maximum(ref, 0.0).astype(jnp.bfloat16)
    ref = jnp.dot(ref, w3.astype(jnp.bfloat16), preferred_element_type=jnp.float32) + b3
    ref = ref.astype(jnp.bfloat16)

    got = logits.astype(jnp.float32)
    want = ref.astype(jnp.float32)
    assert jnp.allclose(got, want, atol=2e-2, rtol=2e-2), (
        float(jnp.max(jnp.abs(got - want))))

    print("KERNEL_OK")
</pallas_src>

<mosaic_0001>
module attributes {stable_mosaic.version = 11 : i64} {
  func.func @_mlp_kernel(%arg0: i32, %arg1: memref<8x768xbf16, #tpu.memory_space<vmem>>, %arg2: memref<768x128xbf16, #tpu.memory_space<vmem>>, %arg3: memref<1x128xf32, #tpu.memory_space<vmem>>, %arg4: memref<128x128xbf16, #tpu.memory_space<vmem>>, %arg5: memref<1x128xf32, #tpu.memory_space<vmem>>, %arg6: memref<128x128xbf16, #tpu.memory_space<vmem>>, %arg7: memref<1x128xf32, #tpu.memory_space<vmem>>, %arg8: memref<8x128xbf16, #tpu.memory_space<vmem>>) attributes {dimension_semantics = [#tpu.dimension_semantics<parallel>], iteration_bounds = array<i64: 1>, scalar_prefetch = 0 : i64, scratch_operands = 0 : i64, tpu.core_type = #tpu.core_type<tc>, window_params = [{transform_indices = @transform_0, window_bounds = array<i64: 8, 768>}, {pipeline_mode = #tpu.pipeline_mode<synchronous>, transform_indices = @transform_1, window_bounds = array<i64: 768, 128>}, {pipeline_mode = #tpu.pipeline_mode<synchronous>, transform_indices = @transform_2, window_bounds = array<i64: 1, 128>}, {pipeline_mode = #tpu.pipeline_mode<synchronous>, transform_indices = @transform_3, window_bounds = array<i64: 128, 128>}, {pipeline_mode = #tpu.pipeline_mode<synchronous>, transform_indices = @transform_4, window_bounds = array<i64: 1, 128>}, {pipeline_mode = #tpu.pipeline_mode<synchronous>, transform_indices = @transform_5, window_bounds = array<i64: 128, 128>}, {pipeline_mode = #tpu.pipeline_mode<synchronous>, transform_indices = @transform_6, window_bounds = array<i64: 1, 128>}, {transform_indices = @transform_7, window_bounds = array<i64: 8, 128>}]} {
    %c0 = arith.constant 0 : index
    %c0_0 = arith.constant 0 : index
    %0 = vector.load %arg1[%c0, %c0_0] : memref<8x768xbf16, #tpu.memory_space<vmem>>, vector<8x768xbf16>
    %c0_1 = arith.constant 0 : index
    %c0_2 = arith.constant 0 : index
    %1 = vector.load %arg2[%c0_1, %c0_2] : memref<768x128xbf16, #tpu.memory_space<vmem>>, vector<768x128xbf16>
    %cst = arith.constant dense<0.000000e+00> : vector<8x128xf32>
    %2 = tpu.matmul %0, %1, %cst {dimension_numbers = #tpu.dot_dimension_numbers<[1], [0], [0], [1], [0, 0, 1, 1], [], []>} : vector<8x768xbf16>, vector<768x128xbf16>, vector<8x128xf32> -> vector<8x128xf32>
    %c0_3 = arith.constant 0 : index
    %c0_4 = arith.constant 0 : index
    %3 = vector.load %arg3[%c0_3, %c0_4] : memref<1x128xf32, #tpu.memory_space<vmem>>, vector<1x128xf32>
    %4 = vector.broadcast %3 : vector<1x128xf32> to vector<8x128xf32>
    %5 = arith.addf %2, %4 : vector<8x128xf32>
    %cst_5 = arith.constant 0.000000e+00 : f32
    %6 = vector.broadcast %cst_5 : f32 to vector<8x128xf32>
    %7 = arith.maximumf %5, %6 : vector<8x128xf32>
    %8 = arith.truncf %7 : vector<8x128xf32> to vector<8x128xbf16>
    %c0_6 = arith.constant 0 : index
    %c0_7 = arith.constant 0 : index
    %9 = vector.load %arg4[%c0_6, %c0_7] : memref<128x128xbf16, #tpu.memory_space<vmem>>, vector<128x128xbf16>
    %cst_8 = arith.constant dense<0.000000e+00> : vector<8x128xf32>
    %10 = tpu.matmul %8, %9, %cst_8 {dimension_numbers = #tpu.dot_dimension_numbers<[1], [0], [0], [1], [0, 0, 1, 1], [], []>} : vector<8x128xbf16>, vector<128x128xbf16>, vector<8x128xf32> -> vector<8x128xf32>
    %c0_9 = arith.constant 0 : index
    %c0_10 = arith.constant 0 : index
    %11 = vector.load %arg5[%c0_9, %c0_10] : memref<1x128xf32, #tpu.memory_space<vmem>>, vector<1x128xf32>
    %12 = vector.broadcast %11 : vector<1x128xf32> to vector<8x128xf32>
    %13 = arith.addf %10, %12 : vector<8x128xf32>
    %cst_11 = arith.constant 0.000000e+00 : f32
    %14 = vector.broadcast %cst_11 : f32 to vector<8x128xf32>
    %15 = arith.maximumf %13, %14 : vector<8x128xf32>
    %16 = arith.truncf %15 : vector<8x128xf32> to vector<8x128xbf16>
    %c0_12 = arith.constant 0 : index
    %c0_13 = arith.constant 0 : index
    %17 = vector.load %arg6[%c0_12, %c0_13] : memref<128x128xbf16, #tpu.memory_space<vmem>>, vector<128x128xbf16>
    %cst_14 = arith.constant dense<0.000000e+00> : vector<8x128xf32>
    %18 = tpu.matmul %16, %17, %cst_14 {dimension_numbers = #tpu.dot_dimension_numbers<[1], [0], [0], [1], [0, 0, 1, 1], [], []>} : vector<8x128xbf16>, vector<128x128xbf16>, vector<8x128xf32> -> vector<8x128xf32>
    %c0_15 = arith.constant 0 : index
    %c0_16 = arith.constant 0 : index
    %19 = vector.load %arg7[%c0_15, %c0_16] : memref<1x128xf32, #tpu.memory_space<vmem>>, vector<1x128xf32>
    %20 = vector.broadcast %19 : vector<1x128xf32> to vector<8x128xf32>
    %21 = arith.addf %18, %20 : vector<8x128xf32>
    %22 = arith.truncf %21 : vector<8x128xf32> to vector<8x128xbf16>
    %c0_17 = arith.constant 0 : index
    %c0_18 = arith.constant 0 : index
    %23 = vector.load %arg8[%c0_17, %c0_18] : memref<8x128xbf16, #tpu.memory_space<vmem>>, vector<8x128xbf16>
    tpu.vector_store %arg8[%c0_17, %c0_18], %22 {strides = array<i32>} : memref<8x128xbf16, #tpu.memory_space<vmem>>, vector<8x128xbf16>,
    return
  }
  func.func @transform_0(%arg0: i32) -> (i32, i32) {
    %c0_i32 = arith.constant 0 : i32
    %c0_i32_0 = arith.constant 0 : i32
    return %arg0, %c0_i32 : i32, i32
  }
  func.func @transform_1(%arg0: i32) -> (i32, i32) {
    %c0_i32 = arith.constant 0 : i32
    %c0_i32_0 = arith.constant 0 : i32
    %c0_i32_1 = arith.constant 0 : i32
    return %c0_i32, %c0_i32_0 : i32, i32
  }
  func.func @transform_2(%arg0: i32) -> (i32, i32) {
    %c0_i32 = arith.constant 0 : i32
    %c0_i32_0 = arith.constant 0 : i32
    %c0_i32_1 = arith.constant 0 : i32
    return %c0_i32, %c0_i32_0 : i32, i32
  }
  func.func @transform_3(%arg0: i32) -> (i32, i32) {
    %c0_i32 = arith.constant 0 : i32
    %c0_i32_0 = arith.constant 0 : i32
    %c0_i32_1 = arith.constant 0 : i32
    return %c0_i32, %c0_i32_0 : i32, i32
  }
  func.func @transform_4(%arg0: i32) -> (i32, i32) {
    %c0_i32 = arith.constant 0 : i32
    %c0_i32_0 = arith.constant 0 : i32
    %c0_i32_1 = arith.constant 0 : i32
    return %c0_i32, %c0_i32_0 : i32, i32
  }
  func.func @transform_5(%arg0: i32) -> (i32, i32) {
    %c0_i32 = arith.constant 0 : i32
    %c0_i32_0 = arith.constant 0 : i32
    %c0_i32_1 = arith.constant 0 : i32
    return %c0_i32, %c0_i32_0 : i32, i32
  }
  func.func @transform_6(%arg0: i32) -> (i32, i32) {
    %c0_i32 = arith.constant 0 : i32
    %c0_i32_0 = arith.constant 0 : i32
    %c0_i32_1 = arith.constant 0 : i32
    return %c0_i32, %c0_i32_0 : i32, i32
  }
  func.func @transform_7(%arg0: i32) -> (i32, i32) {
    %c0_i32 = arith.constant 0 : i32
    %c0_i32_0 = arith.constant 0 : i32
    return %arg0, %c0_i32 : i32, i32
  }
}

</mosaic_0001>

<llo_original>
// kernel: tpu_custom_call.1
$region0: #{tpu_custom_call.1}
  #allocation0 [shape = 'u32[]', space=smem, size = 0x4, offset = 0x4, fixed_abs, tag = 'smem constant byte address 0x4 - core index']
  #allocation1 [shape = 'u32[144,128]{1,0:T(1,128)}', space=vmem, size = 0x12000, scoped, tag = 'internal scratch']
  %s0 = inlined_call_operand.hbm [shape: bf16[8,768], index: 0, kind: input, shape index: {}]
  %s1 = inlined_call_operand.hbm [shape: bf16[768,128], index: 1, kind: input, shape index: {}]
  %s2 = inlined_call_operand.vmem [shape: f32[1,128], index: 2, kind: input, shape index: {}]
  %s3 = inlined_call_operand.hbm [shape: bf16[128,128], index: 3, kind: input, shape index: {}]
  %s4 = inlined_call_operand.vmem [shape: f32[1,128], index: 4, kind: input, shape index: {}]
  %s5 = inlined_call_operand.hbm [shape: bf16[128,128], index: 5, kind: input, shape index: {}]
  %s6 = inlined_call_operand.vmem [shape: f32[1,128], index: 6, kind: input, shape index: {}]
  %s7 = inlined_call_operand.hbm [shape: bf16[8,128], index: 7, kind: output, shape index: {}]
  %s8 = sld [smem:[#allocation0]]
  $region54: #{tpu_custom_call.1} parent=0
    _
  %s10 = ssub.s32 1, %s8
  %s11 = scalar_select 0, %s10, %s8
  $region1: #{tpu_custom_call.1} parent=0
    #allocation2 [shape = 'u8[12288]{0}', space=vmem, size = 0x3000, scoped, tag = 'input window, operand 0, single buffered']
    #allocation3 [shape = 's32[1]{0}', space=sflag, size = 0x4, scoped, tag = 'scoped memory for tpu_custom_call.1']
    #allocation4 [shape = 's32[1]{0}', space=sflag, size = 0x4, scoped, tag = 'scoped memory for tpu_custom_call.1']
    #allocation5 [shape = 'u8[196608]{0}', space=vmem, size = 0x30000, scoped, tag = 'input window, operand 1, single buffered']
    #allocation6 [shape = 's32[1]{0}', space=sflag, size = 0x4, scoped, tag = 'scoped memory for tpu_custom_call.1']
    #allocation7 [shape = 'u8[32768]{0}', space=vmem, size = 0x8000, scoped, tag = 'input window, operand 3, single buffered']
    #allocation8 [shape = 'u8[32768]{0}', space=vmem, size = 0x8000, scoped, tag = 'input window, operand 5, single buffered']
    #allocation9 [shape = 's32[1]{0}', space=sflag, size = 0x4, scoped, tag = 'scoped memory for tpu_custom_call.1']
    #allocation10 [shape = 'u8[2048]{0}', space=vmem, size = 0x800, scoped, tag = 'output window, operand 0, single buffered']
    %12 = vsyncpa [#allocation3], 0
    %13 = vsyncpa [#allocation6], 0
    %14 = vsyncpa [#allocation9], 0
    %15 = vsyncpa [#allocation4], 0
    // Predicated region
    $region2: #{tpu_custom_call.1} parent=1 // pred_check
      _
    $region3: #{tpu_custom_call.1} parent=1 // pred_check_branch
      %17 = sbr.rel (0) target = $region5
    $region4: #{tpu_custom_call.1} parent=1 // pred_region
      %s19 = ssub.s32 384, 384
      %20 = vsyncadd [#allocation3], %s19
      %s22 = sshll.u32 [#allocation2], 4
      %s23 = int_to_ptr.vmem [resolvable:$true] %s22
      %25 = dma.hbm_to_vmem [thread:$0]  %s0, 384, %s23, [#allocation3]
    $region5: #{tpu_custom_call.1} parent=1 // pred_fallthru
      _
    // Predicated region
    $region6: #{tpu_custom_call.1} parent=1 // pred_check
      _
    $region7: #{tpu_custom_call.1} parent=1 // pred_check_branch
      %27 = sbr.rel (0) target = $region9
    $region8: #{tpu_custom_call.1} parent=1 // pred_region
      %s29 = ssub.s32 6144, 6144
      %30 = vsyncadd [#allocation6], %s29
      %s31 = sshll.u32 [#allocation5], 4
      %s32 = int_to_ptr.vmem [resolvable:$true] %s31
      %37 = dma.hbm_to_vmem [thread:$0]  %s1, 6144, %s32, [#allocation6], 64, 64, 4
    $region9: #{tpu_custom_call.1} parent=1 // pred_fallthru
      _
    // Predicated region
    $region10: #{tpu_custom_call.1} parent=1 // pred_check
      _
    $region11: #{tpu_custom_call.1} parent=1 // pred_check_branch
      %39 = sbr.rel (0) target = $region13
    $region12: #{tpu_custom_call.1} parent=1 // pred_region
      _
    $region13: #{tpu_custom_call.1} parent=1 // pred_fallthru
      _
    // Predicated region
    $region14: #{tpu_custom_call.1} parent=1 // pred_check
      _
    $region15: #{tpu_custom_call.1} parent=1 // pred_check_branch
      %41 = sbr.rel (0) target = $region17
    $region16: #{tpu_custom_call.1} parent=1 // pred_region
      %s43 = ssub.s32 1024, 1024
      %44 = vsyncadd [#allocation6], %s43
      %s45 = sshll.u32 [#allocation7], 4
      %s46 = int_to_ptr.vmem [resolvable:$true] %s45
      %51 = dma.hbm_to_vmem [thread:$0]  %s3, 1024, %s46, [#allocation6], 64, 64, 4
    $region17: #{tpu_custom_call.1} parent=1 // pred_fallthru
      _
    // Predicated region
    $region18: #{tpu_custom_call.1} parent=1 // pred_check
      _
    $region19: #{tpu_custom_call.1} parent=1 // pred_check_branch
      %53 = sbr.rel (0) target = $region21
    $region20: #{tpu_custom_call.1} parent=1 // pred_region
      _
    $region21: #{tpu_custom_call.1} parent=1 // pred_fallthru
      _
    // Predicated region
    $region22: #{tpu_custom_call.1} parent=1 // pred_check
      _
    $region23: #{tpu_custom_call.1} parent=1 // pred_check_branch
      %55 = sbr.rel (0) target = $region25
    $region24: #{tpu_custom_call.1} parent=1 // pred_region
      %s57 = ssub.s32 1024, 1024
      %58 = vsyncadd [#allocation9], %s57
      %s59 = sshll.u32 [#allocation8], 4
      %s60 = int_to_ptr.vmem [resolvable:$true] %s59
      %65 = dma.hbm_to_vmem [thread:$0]  %s5, 1024, %s60, [#allocation9], 64, 64, 4
    $region25: #{tpu_custom_call.1} parent=1 // pred_fallthru
      _
    // Predicated region
    $region26: #{tpu_custom_call.1} parent=1 // pred_check
      _
    $region27: #{tpu_custom_call.1} parent=1 // pred_check_branch
      %67 = sbr.rel (0) target = $region29
    $region28: #{tpu_custom_call.1} parent=1 // pred_region
      _
    $region29: #{tpu_custom_call.1} parent=1 // pred_fallthru
      _
    // Predicated region
    $region30: #{tpu_custom_call.1} parent=1 // pred_check
      _
    $region31: #{tpu_custom_call.1} parent=1 // pred_check_branch
      %69 = sbr.rel (0) target = $region33
    $region32: #{tpu_custom_call.1} parent=1 // pred_region
      %70 = dma.done [#allocation3], 384
    $region33: #{tpu_custom_call.1} parent=1 // pred_fallthru
      _
    // Predicated region
    $region34: #{tpu_custom_call.1} parent=1 // pred_check
      _
    $region35: #{tpu_custom_call.1} parent=1 // pred_check_branch
      %72 = sbr.rel (0) target = $region37
    $region36: #{tpu_custom_call.1} parent=1 // pred_region
      %73 = dma.done [#allocation6], 6144
    $region37: #{tpu_custom_call.1} parent=1 // pred_fallthru
      _
    // Predicated region
    $region38: #{tpu_custom_call.1} parent=1 // pred_check
      _
    $region39: #{tpu_custom_call.1} parent=1 // pred_check_branch
      %75 = sbr.rel (0) target = $region41
    $region40: #{tpu_custom_call.1} parent=1 // pred_region
      %76 = dma.done [#allocation6], 1024
    $region41: #{tpu_custom_call.1} parent=1 // pred_fallthru
      _
    // Predicated region
    $region42: #{tpu_custom_call.1} parent=1 // pred_check
      _
    $region43: #{tpu_custom_call.1} parent=1 // pred_check_branch
      %78 = sbr.rel (0) target = $region45
    $region44: #{tpu_custom_call.1} parent=1 // pred_region
      %79 = dma.done [#allocation9], 1024
    $region45: #{tpu_custom_call.1} parent=1 // pred_fallthru
      _
    %v81 = vld [vmem:[#allocation2] sm:$0xff]
    %v82 = vld [vmem:[#allocation2 + $0x8] sm:$0xff]
    %v83 = vld [vmem:[#allocation2 + $0x10] sm:$0xff]
    %v84 = vld [vmem:[#allocation5] sm:$0xf]
    %v85 = vld [vmem:[#allocation5 + $0x4] sm:$0xf]
    %v86 = vld [vmem:[#allocation5 + $0x8] sm:$0xf]
    %v87 = vld [vmem:[#allocation5 + $0xc] sm:$0xf]
    %v88 = vld [vmem:[#allocation5 + $0x10] sm:$0xf]
    %v89 = vld [vmem:[#allocation5 + $0x14] sm:$0xf]
    %v90 = vld [vmem:[#allocation5 + $0x18] sm:$0xf]
    %v91 = vld [vmem:[#allocation5 + $0x1c] sm:$0xf]
    %v92 = vld [vmem:[#allocation5 + $0x20] sm:$0xf]
    %v93 = vld [vmem:[#allocation5 + $0x24] sm:$0xf]
    %v94 = vld [vmem:[#allocation5 + $0x28] sm:$0xf]
    %v95 = vld [vmem:[#allocation5 + $0x2c] sm:$0xf]
    %v96 = vld [vmem:[#allocation5 + $0x30] sm:$0xf]
    %v97 = vld [vmem:[#allocation5 + $0x34] sm:$0xf]
    %v98 = vld [vmem:[#allocation5 + $0x38] sm:$0xf]
    %v99 = vld [vmem:[#allocation5 + $0x3c] sm:$0xf]
    %v100 = vld [vmem:[#allocation5 + $0x40] sm:$0xf]
    %v101 = vld [vmem:[#allocation5 + $0x44] sm:$0xf]
    %v102 = vld [vmem:[#allocation5 + $0x48] sm:$0xf]
    %v103 = vld [vmem:[#allocation5 + $0x4c] sm:$0xf]
    %v104 = vld [vmem:[#allocation5 + $0x50] sm:$0xf]
    %v105 = vld [vmem:[#allocation5 + $0x54] sm:$0xf]
    %v106 = vld [vmem:[#allocation5 + $0x58] sm:$0xf]
    %v107 = vld [vmem:[#allocation5 + $0x5c] sm:$0xf]
    %v108 = vld [vmem:[#allocation5 + $0x60] sm:$0xf]
    %v109 = vld [vmem:[#allocation5 + $0x64] sm:$0xf]
    %v110 = vld [vmem:[#allocation5 + $0x68] sm:$0xf]
    %v111 = vld [vmem:[#allocation5 + $0x6c] sm:$0xf]
    %v112 = vld [vmem:[#allocation5 + $0x70] sm:$0xf]
    %v113 = vld [vmem:[#allocation5 + $0x74] sm:$0xf]
    %v114 = vld [vmem:[#allocation5 + $0x78] sm:$0xf]
    %v115 = vld [vmem:[#allocation5 + $0x7c] sm:$0xf]
    %v116 = vld [vmem:[#allocation5 + $0x80] sm:$0xf]
    %v117 = vld [vmem:[#allocation5 + $0x84] sm:$0xf]
    %v118 = vld [vmem:[#allocation5 + $0x88] sm:$0xf]
    %v119 = vld [vmem:[#allocation5 + $0x8c] sm:$0xf]
    %v120 = vld [vmem:[#allocation5 + $0x90] sm:$0xf]
    %v121 = vld [vmem:[#allocation5 + $0x94] sm:$0xf]
    %v122 = vld [vmem:[#allocation5 + $0x98] sm:$0xf]
    %v123 = vld [vmem:[#allocation5 + $0x9c] sm:$0xf]
    %v124 = vld [vmem:[#allocation5 + $0xa0] sm:$0xf]
    %v125 = vld [vmem:[#allocation5 + $0xa4] sm:$0xf]
    %v126 = vld [vmem:[#allocation5 + $0xa8] sm:$0xf]
    %v127 = vld [vmem:[#allocation5 + $0xac] sm:$0xf]
    %v128 = vld [vmem:[#allocation5 + $0xb0] sm:$0xf]
    %v129 = vld [vmem:[#allocation5 + $0xb4] sm:$0xf]
    %v130 = vld [vmem:[#allocation5 + $0xb8] sm:$0xf]
    %v131 = vld [vmem:[#allocation5 + $0xbc] sm:$0xf]
    %v132 = vld [vmem:[#allocation5 + $0xc0] sm:$0xf]
    %v133 = vld [vmem:[#allocation5 + $0xc4] sm:$0xf]
    %v134 = vld [vmem:[#allocation5 + $0xc8] sm:$0xf]
    %v135 = vld [vmem:[#allocation5 + $0xcc] sm:$0xf]
    %v136 = vld [vmem:[#allocation5 + $0xd0] sm:$0xf]
    %v137 = vld [vmem:[#allocation5 + $0xd4] sm:$0xf]
    %v138 = vld [vmem:[#allocation5 + $0xd8] sm:$0xf]
    %v139 = vld [vmem:[#allocation5 + $0xdc] sm:$0xf]
    %v140 = vld [vmem:[#allocation5 + $0xe0] sm:$0xf]
    %v141 = vld [vmem:[#allocation5 + $0xe4] sm:$0xf]
    %v142 = vld [vmem:[#allocation5 + $0xe8] sm:$0xf]
    %v143 = vld [vmem:[#allocation5 + $0xec] sm:$0xf]
    %v144 = vld [vmem:[#allocation5 + $0xf0] sm:$0xf]
    %v145 = vld [vmem:[#allocation5 + $0xf4] sm:$0xf]
    %v146 = vld [vmem:[#allocation5 + $0xf8] sm:$0xf]
    %v147 = vld [vmem:[#allocation5 + $0xfc] sm:$0xf]
    %v148 = vld [vmem:[#allocation5 + $0x100] sm:$0xf]
    %v149 = vld [vmem:[#allocation5 + $0x104] sm:$0xf]
    %v150 = vld [vmem:[#allocation5 + $0x108] sm:$0xf]
    %v151 = vld [vmem:[#allocation5 + $0x10c] sm:$0xf]
    %v152 = vld [vmem:[#allocation5 + $0x110] sm:$0xf]
    %v153 = vld [vmem:[#allocation5 + $0x114] sm:$0xf]
    %v154 = vld [vmem:[#allocation5 + $0x118] sm:$0xf]
    %v155 = vld [vmem:[#allocation5 + $0x11c] sm:$0xf]
    %v156 = vld [vmem:[#allocation5 + $0x120] sm:$0xf]
    %v157 = vld [vmem:[#allocation5 + $0x124] sm:$0xf]
    %v158 = vld [vmem:[#allocation5 + $0x128] sm:$0xf]
    %v159 = vld [vmem:[#allocation5 + $0x12c] sm:$0xf]
    %v160 = vld [vmem:[#allocation5 + $0x130] sm:$0xf]
    %v161 = vld [vmem:[#allocation5 + $0x134] sm:$0xf]
    %v162 = vld [vmem:[#allocation5 + $0x138] sm:$0xf]
    %v163 = vld [vmem:[#allocation5 + $0x13c] sm:$0xf]
    %v164 = vld [vmem:[#allocation5 + $0x140] sm:$0xf]
    %v165 = vld [vmem:[#allocation5 + $0x144] sm:$0xf]
    %v166 = vld [vmem:[#allocation5 + $0x148] sm:$0xf]
    %v167 = vld [vmem:[#allocation5 + $0x14c] sm:$0xf]
    %v168 = vld [vmem:[#allocation5 + $0x150] sm:$0xf]
    %v169 = vld [vmem:[#allocation5 + $0x154] sm:$0xf]
    %v170 = vld [vmem:[#allocation5 + $0x158] sm:$0xf]
    %v171 = vld [vmem:[#allocation5 + $0x15c] sm:$0xf]
    %v172 = vld [vmem:[#allocation5 + $0x160] sm:$0xf]
    %v173 = vld [vmem:[#allocation5 + $0x164] sm:$0xf]
    %v174 = vld [vmem:[#allocation5 + $0x168] sm:$0xf]
    %v175 = vld [vmem:[#allocation5 + $0x16c] sm:$0xf]
    %v176 = vld [vmem:[#allocation5 + $0x170] sm:$0xf]
    %v177 = vld [vmem:[#allocation5 + $0x174] sm:$0xf]
    %v178 = vld [vmem:[#allocation5 + $0x178] sm:$0xf]
    %v179 = vld [vmem:[#allocation5 + $0x17c] sm:$0xf]
    %v180 = vld [vmem:[%s2] sm:$0x1]
    %v182 = vlaneseq
    %v183 = vshrl.u32 %v182, 7
    %v184 = vsub.s32 0, %v183
    %v185 = vrot.slane %v180, %v184
    %v190 = vunpack.c.l.b16 %v81
    %v191 = vunpack.c.h.b16 %v81
    %v192 = vunpack.c.l.b16 %v82
    %v193 = vunpack.c.h.b16 %v82
    %v194 = vunpack.c.l.b16 %v83
    %v195 = vunpack.c.h.b16 %v83
    %v196 = vpack.c.b16 %v190, %v190
    %v197 = vpack.c.b16 %v191, %v191
    %v198 = vpack.c.b16 %v192, %v192
    %v199 = vpack.c.b16 %v193, %v193
    %v200 = vpack.c.b16 %v194, %v194
    %v201 = vpack.c.b16 %v195, %v195
    %v304 = vunpack.c.l.b16 %v84
    %v305 = vunpack.c.l.b16 %v85
    %v306 = vunpack.c.l.b16 %v86
    %v307 = vunpack.c.l.b16 %v87
    %v308 = vunpack.c.l.b16 %v88
    %v309 = vunpack.c.l.b16 %v89
    %v310 = vunpack.c.l.b16 %v90
    %v311 = vunpack.c.l.b16 %v91
    %v312 = vunpack.c.l.b16 %v92
    %v313 = vunpack.c.l.b16 %v93
    %v314 = vunpack.c.l.b16 %v94
    %v315 = vunpack.c.l.b16 %v95
    %v316 = vunpack.c.l.b16 %v96
    %v317 = vunpack.c.l.b16 %v97
    %v318 = vunpack.c.l.b16 %v98
    %v319 = vunpack.c.l.b16 %v99
    %v320 = vunpack.c.l.b16 %v100
    %v321 = vunpack.c.l.b16 %v101
    %v322 = vunpack.c.l.b16 %v102
    %v323 = vunpack.c.l.b16 %v103
    %v324 = vunpack.c.l.b16 %v104
    %v325 = vunpack.c.l.b16 %v105
    %v326 = vunpack.c.l.b16 %v106
    %v327 = vunpack.c.l.b16 %v107
    %v328 = vunpack.c.l.b16 %v108
    %v329 = vunpack.c.l.b16 %v109
    %v330 = vunpack.c.l.b16 %v110
    %v331 = vunpack.c.l.b16 %v111
    %v332 = vunpack.c.l.b16 %v112
    %v333 = vunpack.c.l.b16 %v113
    %v334 = vunpack.c.l.b16 %v114
    %v335 = vunpack.c.l.b16 %v115
    %v336 = vunpack.c.l.b16 %v116
    %v337 = vunpack.c.l.b16 %v117
    %v338 = vunpack.c.l.b16 %v118
    %v339 = vunpack.c.l.b16 %v119
    %v340 = vunpack.c.l.b16 %v120
    %v341 = vunpack.c.l.b16 %v121
    %v342 = vunpack.c.l.b16 %v122
    %v343 = vunpack.c.l.b16 %v123
    %v344 = vunpack.c.l.b16 %v124
    %v345 = vunpack.c.l.b16 %v125
    %v346 = vunpack.c.l.b16 %v126
    %v347 = vunpack.c.l.b16 %v127
    %v348 = vunpack.c.l.b16 %v128
    %v349 = vunpack.c.l.b16 %v129
    %v350 = vunpack.c.l.b16 %v130
    %v351 = vunpack.c.l.b16 %v131
    %v352 = vunpack.c.l.b16 %v132
    %v353 = vunpack.c.l.b16 %v133
    %v354 = vunpack.c.l.b16 %v134
    %v355 = vunpack.c.l.b16 %v135
    %v356 = vunpack.c.l.b16 %v136
    %v357 = vunpack.c.l.b16 %v137
    %v358 = vunpack.c.l.b16 %v138
    %v359 = vunpack.c.l.b16 %v139
    %v360 = vunpack.c.l.b16 %v140
    %v361 = vunpack.c.l.b16 %v141
    %v362 = vunpack.c.l.b16 %v142
    %v363 = vunpack.c.l.b16 %v143
    %v364 = vunpack.c.l.b16 %v144
    %v365 = vunpack.c.l.b16 %v145
    %v366 = vunpack.c.l.b16 %v146
    %v367 = vunpack.c.l.b16 %v147
    %v368 = vunpack.c.l.b16 %v148
    %v369 = vunpack.c.l.b16 %v149
    %v370 = vunpack.c.l.b16 %v150
    %v371 = vunpack.c.l.b16 %v151
    %v372 = vunpack.c.l.b16 %v152
    %v373 = vunpack.c.l.b16 %v153
    %v374 = vunpack.c.l.b16 %v154
    %v375 = vunpack.c.l.b16 %v155
    %v376 = vunpack.c.l.b16 %v156
    %v377 = vunpack.c.l.b16 %v157
    %v378 = vunpack.c.l.b16 %v158
    %v379 = vunpack.c.l.b16 %v159
    %v380 = vunpack.c.l.b16 %v160
    %v381 = vunpack.c.l.b16 %v161
    %v382 = vunpack.c.l.b16 %v162
    %v383 = vunpack.c.l.b16 %v163
    %v384 = vunpack.c.l.b16 %v164
    %v385 = vunpack.c.l.b16 %v165
    %v386 = vunpack.c.l.b16 %v166
    %v387 = vunpack.c.l.b16 %v167
    %v388 = vunpack.c.l.b16 %v168
    %v389 = vunpack.c.l.b16 %v169
    %v390 = vunpack.c.l.b16 %v170
    %v391 = vunpack.c.l.b16 %v171
    %v392 = vunpack.c.l.b16 %v172
    %v393 = vunpack.c.l.b16 %v173
    %v394 = vunpack.c.l.b16 %v174
    %v395 = vunpack.c.l.b16 %v175
    %v396 = vunpack.c.l.b16 %v176
    %v397 = vunpack.c.l.b16 %v177
    %v398 = vunpack.c.l.b16 %v178
    %v399 = vunpack.c.l.b16 %v179
    %v400 = vpack.c.b16 %v305, %v304
    %v401 = vpack.c.b16 %v307, %v306
    %v402 = vpack.c.b16 %v309, %v308
    %v403 = vpack.c.b16 %v311, %v310
    %v404 = vpack.c.b16 %v313, %v312
    %v405 = vpack.c.b16 %v315, %v314
    %v406 = vpack.c.b16 %v317, %v316
    %v407 = vpack.c.b16 %v319, %v318
    %v408 = vpack.c.b16 %v321, %v320
    %v409 = vpack.c.b16 %v323, %v322
    %v410 = vpack.c.b16 %v325, %v324
    %v411 = vpack.c.b16 %v327, %v326
    %v412 = vpack.c.b16 %v329, %v328
    %v413 = vpack.c.b16 %v331, %v330
    %v414 = vpack.c.b16 %v333, %v332
    %v415 = vpack.c.b16 %v335, %v334
    %v416 = vpack.c.b16 %v337, %v336
    %v417 = vpack.c.b16 %v339, %v338
    %v418 = vpack.c.b16 %v341, %v340
    %v419 = vpack.c.b16 %v343, %v342
    %v420 = vpack.c.b16 %v345, %v344
    %v421 = vpack.c.b16 %v347, %v346
    %v422 = vpack.c.b16 %v349, %v348
    %v423 = vpack.c.b16 %v351, %v350
    %v424 = vpack.c.b16 %v353, %v352
    %v425 = vpack.c.b16 %v355, %v354
    %v426 = vpack.c.b16 %v357, %v356
    %v427 = vpack.c.b16 %v359, %v358
    %v428 = vpack.c.b16 %v361, %v360
    %v429 = vpack.c.b16 %v363, %v362
    %v430 = vpack.c.b16 %v365, %v364
    %v431 = vpack.c.b16 %v367, %v366
    %v432 = vpack.c.b16 %v369, %v368
    %v433 = vpack.c.b16 %v371, %v370
    %v434 = vpack.c.b16 %v373, %v372
    %v435 = vpack.c.b16 %v375, %v374
    %v436 = vpack.c.b16 %v377, %v376
    %v437 = vpack.c.b16 %v379, %v378
    %v438 = vpack.c.b16 %v381, %v380
    %v439 = vpack.c.b16 %v383, %v382
    %v440 = vpack.c.b16 %v385, %v384
    %v441 = vpack.c.b16 %v387, %v386
    %v442 = vpack.c.b16 %v389, %v388
    %v443 = vpack.c.b16 %v391, %v390
    %v444 = vpack.c.b16 %v393, %v392
    %v445 = vpack.c.b16 %v395, %v394
    %v446 = vpack.c.b16 %v397, %v396
    %v447 = vpack.c.b16 %v399, %v398
    %496 = vmatprep.subr.bf16.mxu0 0
    %497 = vmatpush1.bf16.msra.mxu0 %v400
    %498 = vmatprep.subr.bf16.mxu0 0
    %499 = vmatpush1.bf16.msra.mxu0 %v401
    %500 = vmatprep.subr.bf16.mxu0 0
    %501 = vmatpush1.bf16.msra.mxu0 %v402
    %502 = vmatprep.subr.bf16.mxu0 0
    %503 = vmatpush1.bf16.msra.mxu0 %v403
    %504 = vmatprep.subr.bf16.mxu0 0
    %505 = vmatpush1.bf16.msra.mxu0 %v404
    %506 = vmatprep.subr.bf16.mxu0 0
    %507 = vmatpush1.bf16.msra.mxu0 %v405
    %508 = vmatprep.subr.bf16.mxu0 0
    %509 = vmatpush1.bf16.msra.mxu0 %v406
    %510 = vmatprep.subr.bf16.mxu0 0
    %511 = vmatpush1.bf16.msra.mxu0 %v407
    %512 = vmatprep.subr.bf16.mxu0 0
    %513 = vmatpush1.bf16.msra.mxu0 %v408
    %514 = vmatprep.subr.bf16.mxu0 0
    %515 = vmatpush1.bf16.msra.mxu0 %v409
    %516 = vmatprep.subr.bf16.mxu0 0
    %517 = vmatpush1.bf16.msra.mxu0 %v410
    %518 = vmatprep.subr.bf16.mxu0 0
    %519 = vmatpush1.bf16.msra.mxu0 %v411
    %520 = vmatprep.subr.bf16.mxu0 0
    %521 = vmatpush1.bf16.msra.mxu0 %v412
    %522 = vmatprep.subr.bf16.mxu0 0
    %523 = vmatpush1.bf16.msra.mxu0 %v413
    %524 = vmatprep.subr.bf16.mxu0 0
    %525 = vmatpush1.bf16.msra.mxu0 %v414
    %526 = vmatprep.subr.bf16.mxu0 0
    %527 = vmatpush1.bf16.msra.mxu0 %v415
    %528 = vmatprep.mubr.bf16.mxu0 %v197
    %529 = vmatmul.mubr.bf16.gmra.mrb[0].mxu0 %v196
    %v530 = vpop.f32.mrb[0].mxu0
    %v531 = vadd.f32 %v185, %v530
    %v532 = vpop.f32.mrb[0].mxu0
    %v533 = vpop.f32.mrb[0].mxu0
    %v534 = vpop.f32.mrb[0].mxu0
    %535 = vdwg.mxu0
    %536 = vmatprep.subr.bf16.mxu0 0
    %537 = vmatpush1.bf16.msra.mxu0 %v416
    %538 = vmatprep.subr.bf16.mxu0 0
    %539 = vmatpush1.bf16.msra.mxu0 %v417
    %540 = vmatprep.subr.bf16.mxu0 0
    %541 = vmatpush1.bf16.msra.mxu0 %v418
    %542 = vmatprep.subr.bf16.mxu0 0
    %543 = vmatpush1.bf16.msra.mxu0 %v419
    %544 = vmatprep.subr.bf16.mxu0 0
    %545 = vmatpush1.bf16.msra.mxu0 %v420
    %546 = vmatprep.subr.bf16.mxu0 0
    %547 = vmatpush1.bf16.msra.mxu0 %v421
    %548 = vmatprep.subr.bf16.mxu0 0
    %549 = vmatpush1.bf16.msra.mxu0 %v422
    %550 = vmatprep.subr.bf16.mxu0 0
    %551 = vmatpush1.bf16.msra.mxu0 %v423
    %552 = vmatprep.subr.bf16.mxu0 0
    %553 = vmatpush1.bf16.msra.mxu0 %v424
    %554 = vmatprep.subr.bf16.mxu0 0
    %555 = vmatpush1.bf16.msra.mxu0 %v425
    %556 = vmatprep.subr.bf16.mxu0 0
    %557 = vmatpush1.bf16.msra.mxu0 %v426
    %558 = vmatprep.subr.bf16.mxu0 0
    %559 = vmatpush1.bf16.msra.mxu0 %v427
    %560 = vmatprep.subr.bf16.mxu0 0
    %561 = vmatpush1.bf16.msra.mxu0 %v428
    %562 = vmatprep.subr.bf16.mxu0 0
    %563 = vmatpush1.bf16.msra.mxu0 %v429
    %564 = vmatprep.subr.bf16.mxu0 0
    %565 = vmatpush1.bf16.msra.mxu0 %v430
    %566 = vmatprep.subr.bf16.mxu0 0
    %567 = vmatpush1.bf16.msra.mxu0 %v431
    %568 = vmatprep.mubr.bf16.mxu0 %v199
    %569 = vmatmul.mubr.bf16.gmra.mrb[0].mxu0 %v198
    %v570 = vpop.f32.mrb[0].mxu0
    %v571 = vadd.f32 %v531, %v570
    %v572 = vpop.f32.mrb[0].mxu0
    %v573 = vpop.f32.mrb[0].mxu0
    %v574 = vpop.f32.mrb[0].mxu0
    %575 = vdwg.mxu0
    %576 = vmatprep.subr.bf16.mxu0 0
    %577 = vmatpush1.bf16.msra.mxu0 %v432
    %578 = vmatprep.subr.bf16.mxu0 0
    %579 = vmatpush1.bf16.msra.mxu0 %v433
    %580 = vmatprep.subr.bf16.mxu0 0
    %581 = vmatpush1.bf16.msra.mxu0 %v434
    %582 = vmatprep.subr.bf16.mxu0 0
    %583 = vmatpush1.bf16.msra.mxu0 %v435
    %584 = vmatprep.subr.bf16.mxu0 0
    %585 = vmatpush1.bf16.msra.mxu0 %v436
    %586 = vmatprep.subr.bf16.mxu0 0
    %587 = vmatpush1.bf16.msra.mxu0 %v437
    %588 = vmatprep.subr.bf16.mxu0 0
    %589 = vmatpush1.bf16.msra.mxu0 %v438
    %590 = vmatprep.subr.bf16.mxu0 0
    %591 = vmatpush1.bf16.msra.mxu0 %v439
    %592 = vmatprep.subr.bf16.mxu0 0
    %593 = vmatpush1.bf16.msra.mxu0 %v440
    %594 = vmatprep.subr.bf16.mxu0 0
    %595 = vmatpush1.bf16.msra.mxu0 %v441
    %596 = vmatprep.subr.bf16.mxu0 0
    %597 = vmatpush1.bf16.msra.mxu0 %v442
    %598 = vmatprep.subr.bf16.mxu0 0
    %599 = vmatpush1.bf16.msra.mxu0 %v443
    %600 = vmatprep.subr.bf16.mxu0 0
    %601 = vmatpush1.bf16.msra.mxu0 %v444
    %602 = vmatprep.subr.bf16.mxu0 0
    %603 = vmatpush1.bf16.msra.mxu0 %v445
    %604 = vmatprep.subr.bf16.mxu0 0
    %605 = vmatpush1.bf16.msra.mxu0 %v446
    %606 = vmatprep.subr.bf16.mxu0 0
    %607 = vmatpush1.bf16.msra.mxu0 %v447
    %608 = vmatprep.mubr.bf16.mxu0 %v201
    %609 = vmatmul.mubr.bf16.gmra.mrb[0].mxu0 %v200
    %v610 = vpop.f32.mrb[0].mxu0
    %v611 = vadd.f32 %v571, %v610
    %v612 = vpop.f32.mrb[0].mxu0
    %v613 = vpop.f32.mrb[0].mxu0
    %v614 = vpop.f32.mrb[0].mxu0
    %615 = vdwg.mxu0
    %v616 = vmax.f32 %v611, 0.0
    %v617 = vpack.c.bf16 %v616, %v616
    %v618 = vld [vmem:[#allocation7] sm:$0xf]
    %v619 = vld [vmem:[#allocation7 + $0x4] sm:$0xf]
    %v620 = vld [vmem:[#allocation7 + $0x8] sm:$0xf]
    %v621 = vld [vmem:[#allocation7 + $0xc] sm:$0xf]
    %v622 = vld [vmem:[#allocation7 + $0x10] sm:$0xf]
    %v623 = vld [vmem:[#allocation7 + $0x14] sm:$0xf]
    %v624 = vld [vmem:[#allocation7 + $0x18] sm:$0xf]
    %v625 = vld [vmem:[#allocation7 + $0x1c] sm:$0xf]
    %v626 = vld [vmem:[#allocation7 + $0x20] sm:$0xf]
    %v627 = vld [vmem:[#allocation7 + $0x24] sm:$0xf]
    %v628 = vld [vmem:[#allocation7 + $0x28] sm:$0xf]
    %v629 = vld [vmem:[#allocation7 + $0x2c] sm:$0xf]
    %v630 = vld [vmem:[#allocation7 + $0x30] sm:$0xf]
    %v631 = vld [vmem:[#allocation7 + $0x34] sm:$0xf]
    %v632 = vld [vmem:[#allocation7 + $0x38] sm:$0xf]
    %v633 = vld [vmem:[#allocation7 + $0x3c] sm:$0xf]
    %v634 = vld [vmem:[%s4] sm:$0x1]
    %v636 = vlaneseq
    %v637 = vshrl.u32 %v636, 7
    %v638 = vsub.s32 0, %v637
    %v639 = vrot.slane %v634, %v638
    %v657 = vunpack.c.l.b16 %v618
    %v658 = vunpack.c.l.b16 %v619
    %v659 = vunpack.c.l.b16 %v620
    %v660 = vunpack.c.l.b16 %v621
    %v661 = vunpack.c.l.b16 %v622
    %v662 = vunpack.c.l.b16 %v623
    %v663 = vunpack.c.l.b16 %v624
    %v664 = vunpack.c.l.b16 %v625
    %v665 = vunpack.c.l.b16 %v626
    %v666 = vunpack.c.l.b16 %v627
    %v667 = vunpack.c.l.b16 %v628
    %v668 = vunpack.c.l.b16 %v629
    %v669 = vunpack.c.l.b16 %v630
    %v670 = vunpack.c.l.b16 %v631
    %v671 = vunpack.c.l.b16 %v632
    %v672 = vunpack.c.l.b16 %v633
    %v673 = vpack.c.b16 %v658, %v657
    %v674 = vpack.c.b16 %v660, %v659
    %v675 = vpack.c.b16 %v662, %v661
    %v676 = vpack.c.b16 %v664, %v663
    %v677 = vpack.c.b16 %v666, %v665
    %v678 = vpack.c.b16 %v668, %v667
    %v679 = vpack.c.b16 %v670, %v669
    %v680 = vpack.c.b16 %v672, %v671
    %689 = vmatprep.subr.bf16.mxu0 0
    %690 = vmatpush1.bf16.msra.mxu0 %v673
    %691 = vmatprep.subr.bf16.mxu0 0
    %692 = vmatpush1.bf16.msra.mxu0 %v674
    %693 = vmatprep.subr.bf16.mxu0 0
    %694 = vmatpush1.bf16.msra.mxu0 %v675
    %695 = vmatprep.subr.bf16.mxu0 0
    %696 = vmatpush1.bf16.msra.mxu0 %v676
    %697 = vmatprep.subr.bf16.mxu0 0
    %698 = vmatpush1.bf16.msra.mxu0 %v677
    %699 = vmatprep.subr.bf16.mxu0 0
    %700 = vmatpush1.bf16.msra.mxu0 %v678
    %701 = vmatprep.subr.bf16.mxu0 0
    %702 = vmatpush1.bf16.msra.mxu0 %v679
    %703 = vmatprep.subr.bf16.mxu0 0
    %704 = vmatpush1.bf16.msra.mxu0 %v680
    %705 = vmatprep.subr.bf16.mxu0 0
    %706 = vmatpush1.bf16.msra.mxu0 0
    %707 = vmatprep.subr.bf16.mxu0 0
    %708 = vmatpush1.bf16.msra.mxu0 0
    %709 = vmatprep.subr.bf16.mxu0 0
    %710 = vmatpush1.bf16.msra.mxu0 0
    %711 = vmatprep.subr.bf16.mxu0 0
    %712 = vmatpush1.bf16.msra.mxu0 0
    %713 = vmatprep.subr.bf16.mxu0 0
    %714 = vmatpush1.bf16.msra.mxu0 0
    %715 = vmatprep.subr.bf16.mxu0 0
    %716 = vmatpush1.bf16.msra.mxu0 0
    %717 = vmatprep.subr.bf16.mxu0 0
    %718 = vmatpush1.bf16.msra.mxu0 0
    %719 = vmatprep.subr.bf16.mxu0 0
    %720 = vmatpush1.bf16.msra.mxu0 0
    %721 = vmatprep.mubr.bf16.mxu0 0
    %722 = vmatmul.mubr.bf16.gmra.mrb[0].mxu0 %v617
    %v723 = vpop.f32.mrb[0].mxu0
    %v724 = vadd.f32 %v639, %v723
    %v725 = vpop.f32.mrb[0].mxu0
    %v726 = vpop.f32.mrb[0].mxu0
    %v727 = vpop.f32.mrb[0].mxu0
    %728 = vdwg.mxu0
    %v729 = vmax.f32 %v724, 0.0
    %v730 = vpack.c.bf16 %v729, %v729
    %v731 = vld [vmem:[#allocation8] sm:$0xf]
    %v732 = vld [vmem:[#allocation8 + $0x4] sm:$0xf]
    %v733 = vld [vmem:[#allocation8 + $0x8] sm:$0xf]
    %v734 = vld [vmem:[#allocation8 + $0xc] sm:$0xf]
    %v735 = vld [vmem:[#allocation8 + $0x10] sm:$0xf]
    %v736 = vld [vmem:[#allocation8 + $0x14] sm:$0xf]
    %v737 = vld [vmem:[#allocation8 + $0x18] sm:$0xf]
    %v738 = vld [vmem:[#allocation8 + $0x1c] sm:$0xf]
    %v739 = vld [vmem:[#allocation8 + $0x20] sm:$0xf]
    %v740 = vld [vmem:[#allocation8 + $0x24] sm:$0xf]
    %v741 = vld [vmem:[#allocation8 + $0x28] sm:$0xf]
    %v742 = vld [vmem:[#allocation8 + $0x2c] sm:$0xf]
    %v743 = vld [vmem:[#allocation8 + $0x30] sm:$0xf]
    %v744 = vld [vmem:[#allocation8 + $0x34] sm:$0xf]
    %v745 = vld [vmem:[#allocation8 + $0x38] sm:$0xf]
    %v746 = vld [vmem:[#allocation8 + $0x3c] sm:$0xf]
    %v747 = vld [vmem:[%s6] sm:$0x1]
    %v749 = vlaneseq
    %v750 = vshrl.u32 %v749, 7
    %v751 = vsub.s32 0, %v750
    %v752 = vrot.slane %v747, %v751
    %v770 = vunpack.c.l.b16 %v731
    %v771 = vunpack.c.l.b16 %v732
    %v772 = vunpack.c.l.b16 %v733
    %v773 = vunpack.c.l.b16 %v734
    %v774 = vunpack.c.l.b16 %v735
    %v775 = vunpack.c.l.b16 %v736
    %v776 = vunpack.c.l.b16 %v737
    %v777 = vunpack.c.l.b16 %v738
    %v778 = vunpack.c.l.b16 %v739
    %v779 = vunpack.c.l.b16 %v740
    %v780 = vunpack.c.l.b16 %v741
    %v781 = vunpack.c.l.b16 %v742
    %v782 = vunpack.c.l.b16 %v743
    %v783 = vunpack.c.l.b16 %v744
    %v784 = vunpack.c.l.b16 %v745
    %v785 = vunpack.c.l.b16 %v746
    %v786 = vpack.c.b16 %v771, %v770
    %v787 = vpack.c.b16 %v773, %v772
    %v788 = vpack.c.b16 %v775, %v774
    %v789 = vpack.c.b16 %v777, %v776
    %v790 = vpack.c.b16 %v779, %v778
    %v791 = vpack.c.b16 %v781, %v780
    %v792 = vpack.c.b16 %v783, %v782
    %v793 = vpack.c.b16 %v785, %v784
    %802 = vmatprep.subr.bf16.mxu0 0
    %803 = vmatpush1.bf16.msra.mxu0 %v786
    %804 = vmatprep.subr.bf16.mxu0 0
    %805 = vmatpush1.bf16.msra.mxu0 %v787
    %806 = vmatprep.subr.bf16.mxu0 0
    %807 = vmatpush1.bf16.msra.mxu0 %v788
    %808 = vmatprep.subr.bf16.mxu0 0
    %809 = vmatpush1.bf16.msra.mxu0 %v789
    %810 = vmatprep.subr.bf16.mxu0 0
    %811 = vmatpush1.bf16.msra.mxu0 %v790
    %812 = vmatprep.subr.bf16.mxu0 0
    %813 = vmatpush1.bf16.msra.mxu0 %v791
    %814 = vmatprep.subr.bf16.mxu0 0
    %815 = vmatpush1.bf16.msra.mxu0 %v792
    %816 = vmatprep.subr.bf16.mxu0 0
    %817 = vmatpush1.bf16.msra.mxu0 %v793
    %818 = vmatprep.subr.bf16.mxu0 0
    %819 = vmatpush1.bf16.msra.mxu0 0
    %820 = vmatprep.subr.bf16.mxu0 0
    %821 = vmatpush1.bf16.msra.mxu0 0
    %822 = vmatprep.subr.bf16.mxu0 0
    %823 = vmatpush1.bf16.msra.mxu0 0
    %824 = vmatprep.subr.bf16.mxu0 0
    %825 = vmatpush1.bf16.msra.mxu0 0
    %826 = vmatprep.subr.bf16.mxu0 0
    %827 = vmatpush1.bf16.msra.mxu0 0
    %828 = vmatprep.subr.bf16.mxu0 0
    %829 = vmatpush1.bf16.msra.mxu0 0
    %830 = vmatprep.subr.bf16.mxu0 0
    %831 = vmatpush1.bf16.msra.mxu0 0
    %832 = vmatprep.subr.bf16.mxu0 0
    %833 = vmatpush1.bf16.msra.mxu0 0
    %834 = vmatprep.mubr.bf16.mxu0 0
    %835 = vmatmul.mubr.bf16.gmra.mrb[0].mxu0 %v730
    %v836 = vpop.f32.mrb[0].mxu0
    %v837 = vadd.f32 %v752, %v836
    %v838 = vpop.f32.mrb[0].mxu0
    %v839 = vpop.f32.mrb[0].mxu0
    %v840 = vpop.f32.mrb[0].mxu0
    %841 = vdwg.mxu0
    %v842 = vpack.c.bf16 %v837, %v837
    %843 = vst [vmem:[#allocation10] sm:$0xf] %v842
    // Predicated region
    $region46: #{tpu_custom_call.1} parent=1 // pred_check
      _
    $region47: #{tpu_custom_call.1} parent=1 // pred_check_branch
      %845 = sbr.rel (0) target = $region49
    $region48: #{tpu_custom_call.1} parent=1 // pred_region
      %s847 = ssub.s32 64, 64
      %848 = vsyncadd [#allocation4], %s847
      %s850 = sshll.u32 [#allocation10], 4
      %s851 = int_to_ptr.vmem [resolvable:$true] %s850
      %853 = dma.vmem_to_hbm [thread:$0]  %s851, 64, %s7, [#allocation4]
    $region49: #{tpu_custom_call.1} parent=1 // pred_fallthru
      _
    // Predicated region
    $region50: #{tpu_custom_call.1} parent=1 // pred_check
      _
    $region51: #{tpu_custom_call.1} parent=1 // pred_check_branch
      %855 = sbr.rel (0) target = $region53
    $region52: #{tpu_custom_call.1} parent=1 // pred_region
      %856 = dma.done [#allocation4], 64
    $region53: #{tpu_custom_call.1} parent=1 // pred_fallthru
      _
    %857 = vsyncpa [#allocation3], 1
    %858 = vsyncpa [#allocation6], 1
    %859 = vsyncpa [#allocation9], 1
    %860 = vsyncpa [#allocation4], 1

</llo_original>
